<compile_context>
chip_gen: v5e
topology: v5e:2x2
jax: 0.10.0
libtpu: 0.0.40
codegen_flags: <defaults>
</compile_context>

<pallas_src>
import jax
import jax.numpy as jnp
from jax.experimental import pallas as pl
from jax.experimental.pallas import tpu as pltpu


_VMEM_INPUT_BUDGET_BYTES = 16 * 1024 * 1024  # double-buffered x+y tiles, all gens


def _pick_block_rows(batch, depth, itemsize):
    """Largest batch tile keeping 2 inputs x 2 pipeline buffers under budget."""
    sublane = max(8, 32 // max(itemsize, 1))   # 8 for f32, 16 for bf16, 32 for int8
    bytes_per_row = 2 * 2 * depth * itemsize   # 2 inputs x 2 pipeline buffers
    tb = _VMEM_INPUT_BUDGET_BYTES // max(bytes_per_row, 1)
    tb = min(tb, 1024)
    if tb >= batch:
        return batch                           # single tile == full array (any B ok)
    return max((tb // sublane) * sublane, sublane)


def euclidean_loss(output1, output2, label, *, block_rows=None):
    """output1/output2: lists of (B, D) arrays; label: (B, 1). Returns scalar loss."""
    x = output1[-1]
    y = output2[-1]
    B, D = x.shape
    assert y.shape == (B, D) and label.shape == (B, 1)

    # NOTE: for tiny problems (B*D ~ 1e3) a plain XLA fusion of the reference
    # expression would beat any pallas_call (fixed launch/DMA-setup cost); the
    # kernel path is kept unconditional here so the harness exercises it.

    itemsize = max(x.dtype.itemsize, y.dtype.itemsize)
    tb = block_rows if block_rows is not None else _pick_block_rows(B, D, itemsize)
    tb = min(tb, B)
    if tb < B:
        sublane = max(8, 32 // itemsize)
        assert tb % sublane == 0, "block_rows must be a sublane multiple when tiling"
    num_tiles = (B + tb - 1) // tb
    needs_mask = (B % tb) != 0

    inv_d = 1.0 / D
    inv_b = 1.0 / B

    # TODO(synk): the PyTorch module logs intermediate stats via self.logger and
    # calls exit() when the mean distance is zero; neither has a kernel equivalent.

    def kernel(x_ref, y_ref, lab_ref, out_ref, acc_ref):
        i = pl.program_id(0)

        @pl.when(i == 0)
        def _init():
            acc_ref[...] = jnp.zeros_like(acc_ref)

        xv = x_ref[...].astype(jnp.float32)
        yv = y_ref[...].astype(jnp.float32)
        lab = lab_ref[...].astype(jnp.float32)

        # One-pass raw moments over D (lanes); no centered vx/vy temporaries.
        sx = jnp.sum(xv, axis=1, keepdims=True)
        sy = jnp.sum(yv, axis=1, keepdims=True)
        sxy = jnp.sum(xv * yv, axis=1, keepdims=True)
        sxx = jnp.sum(xv * xv, axis=1, keepdims=True)
        syy = jnp.sum(yv * yv, axis=1, keepdims=True)

        num = sxy - sx * sy * inv_d
        var_x = sxx - sx * sx * inv_d
        var_y = syy - sy * sy * inv_d
        # Faithful to PyTorch: no epsilon in the denominator (constant row -> NaN).
        pearson = num * jax.lax.rsqrt(var_x * var_y) + 1e-5      # (TB, 1)

        predicted = 1.0 - pearson                                # (TB, 1)
        diff = predicted - lab + 1e-6                            # pairwise_distance eps
        d2 = diff * diff                                         # squared distance

        if needs_mask:
            rows = jax.lax.broadcasted_iota(jnp.int32, d2.shape, 0) + i * tb
            d2 = jnp.where(rows < B, d2, 0.0)                    # drop padded rows

        acc_ref[...] += jnp.sum(d2, axis=0, keepdims=True)       # running sum

        @pl.when(i == pl.num_programs(0) - 1)
        def _finalize():
            out_ref[...] = acc_ref[...] * inv_b                  # mean over true B

    out = pl.pallas_call(
        kernel,
        out_shape=jax.ShapeDtypeStruct((1, 1), jnp.float32),
        grid=(num_tiles,),
        in_specs=[
            pl.BlockSpec((tb, D), lambda i: (i, 0)),
            pl.BlockSpec((tb, D), lambda i: (i, 0)),
            pl.BlockSpec((tb, 1), lambda i: (i, 0)),
        ],
        out_specs=pl.BlockSpec((1, 1), lambda i: (0, 0)),
        scratch_shapes=[pltpu.VMEM((1, 1), jnp.float32)],
        compiler_params=pltpu.CompilerParams(
            dimension_semantics=("arbitrary",),   # sequential accumulation axis
            vmem_limit_bytes=32 * 1024 * 1024,
        ),
    )(x, y, label)
    return out[0, 0]


def _reference(output1, output2, label):
    x = output1[-1].astype(jnp.float32)
    y = output2[-1].astype(jnp.float32)
    xm = jnp.mean(x, axis=1, keepdims=True)
    ym = jnp.mean(y, axis=1, keepdims=True)
    vx, vy = x - xm, y - ym
    num = jnp.sum(vx * vy, axis=1, keepdims=True)
    den = jnp.sqrt(jnp.sum(vx ** 2, axis=1, keepdims=True)) * jnp.sqrt(
        jnp.sum(vy ** 2, axis=1, keepdims=True))
    predicted = 1.0 - (num / den + 1e-5)
    diff = predicted - label + 1e-6
    return jnp.mean(diff * diff)


if __name__ == "__main__":
    key = jax.random.PRNGKey(0)
    k1, k2, k3, k4, k5, k6 = jax.random.split(key, 6)

    # Case 1: single-tile path (B = 8 rows, D = 128 last-layer features).
    B1, D1 = 8, 128
    out1_a = [jax.random.normal(k1, (B1, 64), jnp.float32),
              jax.random.normal(k2, (B1, D1), jnp.float32)]
    out2_a = [jax.random.normal(k3, (B1, 64), jnp.float32),
              jax.random.normal(k4, (B1, D1), jnp.float32)]
    lab_a = (jax.random.uniform(jax.random.PRNGKey(1), (B1, 1), jnp.float32) > 0.5
             ).astype(jnp.float32)
    loss_a = euclidean_loss(out1_a, out2_a, lab_a)
    jax.block_until_ready(loss_a)
    ref_a = _reference(out1_a, out2_a, lab_a)
    assert jnp.allclose(loss_a, ref_a, rtol=1e-4, atol=1e-6), (loss_a, ref_a)

    # Case 2: multi-tile streaming path with a masked partial last tile
    #         (B = 20, TB = 8 -> 3 grid steps, 4 padded rows in the last tile).
    B2, D2 = 20, 128
    out1_b = [jax.random.normal(k5, (B2, D2), jnp.float32)]
    out2_b = [jax.random.normal(k6, (B2, D2), jnp.float32)]
    lab_b = (jax.random.uniform(jax.random.PRNGKey(2), (B2, 1), jnp.float32) > 0.5
             ).astype(jnp.float32)
    loss_b = euclidean_loss(out1_b, out2_b, lab_b, block_rows=8)
    jax.block_until_ready(loss_b)
    ref_b = _reference(out1_b, out2_b, lab_b)
    assert jnp.allclose(loss_b, ref_b, rtol=1e-4, atol=1e-6), (loss_b, ref_b)

    print("KERNEL_OK")
</pallas_src>

<mosaic_0001>
module attributes {stable_mosaic.version = 11 : i64} {
  func.func @kernel(%arg0: i32, %arg1: memref<8x128xf32, #tpu.memory_space<vmem>>, %arg2: memref<8x128xf32, #tpu.memory_space<vmem>>, %arg3: memref<8x1xf32, #tpu.memory_space<vmem>>, %arg4: memref<1x1xf32, #tpu.memory_space<vmem>>, %arg5: memref<1x1xf32, #tpu.memory_space<vmem>>) attributes {dimension_semantics = [#tpu.dimension_semantics<arbitrary>], iteration_bounds = array<i64: 1>, scalar_prefetch = 0 : i64, scratch_operands = 1 : i64, tpu.core_type = #tpu.core_type<tc>, window_params = [{transform_indices = @transform_0, window_bounds = array<i64: 8, 128>}, {transform_indices = @transform_1, window_bounds = array<i64: 8, 128>}, {transform_indices = @transform_2, window_bounds = array<i64: 8, 1>}, {pipeline_mode = #tpu.pipeline_mode<synchronous>, transform_indices = @transform_3, window_bounds = array<i64: 1, 1>}]} {
    %c0_i32 = arith.constant 0 : i32
    %0 = arith.cmpi eq, %arg0, %c0_i32 : i32
    %1 = arith.extui %0 : i1 to i32
    %c0_i32_0 = arith.constant 0 : i32
    %2 = arith.cmpi ne, %1, %c0_i32_0 : i32
    scf.if %2 {
      %cst_23 = arith.constant 0.000000e+00 : f32
      %50 = vector.broadcast %cst_23 : f32 to vector<1x1xf32>
      %c0_24 = arith.constant 0 : index
      %c0_25 = arith.constant 0 : index
      %51 = vector.load %arg5[%c0_24, %c0_25] : memref<1x1xf32, #tpu.memory_space<vmem>>, vector<1x1xf32>
      tpu.vector_store %arg5[%c0_24, %c0_25], %50 {strides = array<i32>} : memref<1x1xf32, #tpu.memory_space<vmem>>, vector<1x1xf32>,
    } else {
    }
    %c0 = arith.constant 0 : index
    %c0_1 = arith.constant 0 : index
    %3 = vector.load %arg1[%c0, %c0_1] : memref<8x128xf32, #tpu.memory_space<vmem>>, vector<8x128xf32>
    %c0_2 = arith.constant 0 : index
    %c0_3 = arith.constant 0 : index
    %4 = vector.load %arg2[%c0_2, %c0_3] : memref<8x128xf32, #tpu.memory_space<vmem>>, vector<8x128xf32>
    %c0_4 = arith.constant 0 : index
    %c0_5 = arith.constant 0 : index
    %5 = vector.load %arg3[%c0_4, %c0_5] : memref<8x1xf32, #tpu.memory_space<vmem>>, vector<8x1xf32>
    %cst = arith.constant dense<0.000000e+00> : vector<8xf32>
    %6 = vector.multi_reduction <add>, %3, %cst [1] : vector<8x128xf32> to vector<8xf32>
    %7 = vector.shape_cast %6 : vector<8xf32> to vector<8x1xf32>
    %cst_6 = arith.constant dense<0.000000e+00> : vector<8xf32>
    %8 = vector.multi_reduction <add>, %4, %cst_6 [1] : vector<8x128xf32> to vector<8xf32>
    %9 = vector.shape_cast %8 : vector<8xf32> to vector<8x1xf32>
    %10 = arith.mulf %3, %4 : vector<8x128xf32>
    %cst_7 = arith.constant dense<0.000000e+00> : vector<8xf32>
    %11 = vector.multi_reduction <add>, %10, %cst_7 [1] : vector<8x128xf32> to vector<8xf32>
    %12 = vector.shape_cast %11 : vector<8xf32> to vector<8x1xf32>
    %13 = arith.mulf %3, %3 : vector<8x128xf32>
    %cst_8 = arith.constant dense<0.000000e+00> : vector<8xf32>
    %14 = vector.multi_reduction <add>, %13, %cst_8 [1] : vector<8x128xf32> to vector<8xf32>
    %15 = vector.shape_cast %14 : vector<8xf32> to vector<8x1xf32>
    %16 = arith.mulf %4, %4 : vector<8x128xf32>
    %cst_9 = arith.constant dense<0.000000e+00> : vector<8xf32>
    %17 = vector.multi_reduction <add>, %16, %cst_9 [1] : vector<8x128xf32> to vector<8xf32>
    %18 = vector.shape_cast %17 : vector<8xf32> to vector<8x1xf32>
    %19 = arith.mulf %7, %9 : vector<8x1xf32>
    %cst_10 = arith.constant 7.812500e-03 : f32
    %20 = vector.broadcast %cst_10 : f32 to vector<8x1xf32>
    %21 = arith.mulf %19, %20 : vector<8x1xf32>
    %22 = arith.subf %12, %21 : vector<8x1xf32>
    %23 = arith.mulf %7, %7 : vector<8x1xf32>
    %cst_11 = arith.constant 7.812500e-03 : f32
    %24 = vector.broadcast %cst_11 : f32 to vector<8x1xf32>
    %25 = arith.mulf %23, %24 : vector<8x1xf32>
    %26 = arith.subf %15, %25 : vector<8x1xf32>
    %27 = arith.mulf %9, %9 : vector<8x1xf32>
    %cst_12 = arith.constant 7.812500e-03 : f32
    %28 = vector.broadcast %cst_12 : f32 to vector<8x1xf32>
    %29 = arith.mulf %27, %28 : vector<8x1xf32>
    %30 = arith.subf %18, %29 : vector<8x1xf32>
    %31 = arith.mulf %26, %30 : vector<8x1xf32>
    %32 = math.rsqrt %31 : vector<8x1xf32>
    %33 = arith.mulf %22, %32 : vector<8x1xf32>
    %cst_13 = arith.constant 9.99999974E-6 : f32
    %34 = vector.broadcast %cst_13 : f32 to vector<8x1xf32>
    %35 = arith.addf %33, %34 : vector<8x1xf32>
    %cst_14 = arith.constant 1.000000e+00 : f32
    %36 = vector.broadcast %cst_14 : f32 to vector<8x1xf32>
    %37 = arith.subf %36, %35 : vector<8x1xf32>
    %38 = arith.subf %37, %5 : vector<8x1xf32>
    %cst_15 = arith.constant 9.99999997E-7 : f32
    %39 = vector.broadcast %cst_15 : f32 to vector<8x1xf32>
    %40 = arith.addf %38, %39 : vector<8x1xf32>
    %41 = arith.mulf %40, %40 : vector<8x1xf32>
    %c0_16 = arith.constant 0 : index
    %c0_17 = arith.constant 0 : index
    %42 = vector.load %arg5[%c0_16, %c0_17] : memref<1x1xf32, #tpu.memory_space<vmem>>, vector<1x1xf32>
    %cst_18 = arith.constant dense<0.000000e+00> : vector<1xf32>
    %43 = vector.multi_reduction <add>, %41, %cst_18 [0] : vector<8x1xf32> to vector<1xf32>
    %44 = vector.shape_cast %43 : vector<1xf32> to vector<1x1xf32>
    %45 = arith.addf %42, %44 : vector<1x1xf32>
    %c0_19 = arith.constant 0 : index
    %c0_20 = arith.constant 0 : index
    %46 = vector.load %arg5[%c0_19, %c0_20] : memref<1x1xf32, #tpu.memory_space<vmem>>, vector<1x1xf32>
    tpu.vector_store %arg5[%c0_19, %c0_20], %45 {strides = array<i32>} : memref<1x1xf32, #tpu.memory_space<vmem>>, vector<1x1xf32>,
    %c0_i32_21 = arith.constant 0 : i32
    %47 = arith.cmpi eq, %arg0, %c0_i32_21 : i32
    %48 = arith.extui %47 : i1 to i32
    %c0_i32_22 = arith.constant 0 : i32
    %49 = arith.cmpi ne, %48, %c0_i32_22 : i32
    scf.if %49 {
      %c0_23 = arith.constant 0 : index
      %c0_24 = arith.constant 0 : index
      %50 = vector.load %arg5[%c0_23, %c0_24] : memref<1x1xf32, #tpu.memory_space<vmem>>, vector<1x1xf32>
      %cst_25 = arith.constant 1.250000e-01 : f32
      %51 = vector.broadcast %cst_25 : f32 to vector<1x1xf32>
      %52 = arith.mulf %50, %51 : vector<1x1xf32>
      %c0_26 = arith.constant 0 : index
      %c0_27 = arith.constant 0 : index
      %53 = vector.load %arg4[%c0_26, %c0_27] : memref<1x1xf32, #tpu.memory_space<vmem>>, vector<1x1xf32>
      tpu.vector_store %arg4[%c0_26, %c0_27], %52 {strides = array<i32>} : memref<1x1xf32, #tpu.memory_space<vmem>>, vector<1x1xf32>,
    } else {
    }
    return
  }
  func.func @transform_0(%arg0: i32) -> (i32, i32) {
    %c0_i32 = arith.constant 0 : i32
    %c0_i32_0 = arith.constant 0 : i32
    return %arg0, %c0_i32 : i32, i32
  }
  func.func @transform_1(%arg0: i32) -> (i32, i32) {
    %c0_i32 = arith.constant 0 : i32
    %c0_i32_0 = arith.constant 0 : i32
    return %arg0, %c0_i32 : i32, i32
  }
  func.func @transform_2(%arg0: i32) -> (i32, i32) {
    %c0_i32 = arith.constant 0 : i32
    %c0_i32_0 = arith.constant 0 : i32
    return %arg0, %c0_i32 : i32, i32
  }
  func.func @transform_3(%arg0: i32) -> (i32, i32) {
    %c0_i32 = arith.constant 0 : i32
    %c0_i32_0 = arith.constant 0 : i32
    %c0_i32_1 = arith.constant 0 : i32
    return %c0_i32, %c0_i32_0 : i32, i32
  }
}

</mosaic_0001>

<llo_original>
// kernel: tpu_custom_call.1
$region0: #{tpu_custom_call.1}
  #allocation0 [shape = 'u32[]', space=smem, size = 0x4, offset = 0x4, fixed_abs, tag = 'smem constant byte address 0x4 - core index']
  #allocation1 [shape = 'u32[72,128]{1,0:T(1,128)}', space=vmem, size = 0x9000, scoped, tag = 'internal scratch']
  #allocation2 [shape = 'f32[1,1]{1,0:T(1,128)}', space=vmem, size = 0x200, scoped, tag = 'scratch operand']
  %s0 = inlined_call_operand.vmem [shape: f32[8,128], index: 0, kind: input, shape index: {}]
  %s1 = inlined_call_operand.hbm [shape: f32[8,128], index: 1, kind: input, shape index: {}]
  %s2 = inlined_call_operand.vmem [shape: f32[8,1], index: 2, kind: input, shape index: {}]
  %s3 = inlined_call_operand.hbm [shape: f32[1,1], index: 3, kind: output, shape index: {}]
  %s4 = sld [smem:[#allocation0]]
  $region34: #{tpu_custom_call.1} parent=0
    _
  %s6 = ssub.s32 1, %s4
  %s7 = scalar_select 0, %s6, %s4
  $region1: #{tpu_custom_call.1} parent=0
    #allocation3 [shape = 'u8[4096]{0}', space=vmem, size = 0x1000, scoped, tag = 'input window, operand 1, single buffered']
    #allocation4 [shape = 's32[1]{0}', space=sflag, size = 0x4, scoped, tag = 'scoped memory for tpu_custom_call.1']
    #allocation5 [shape = 's32[1]{0}', space=sflag, size = 0x4, scoped, tag = 'scoped memory for tpu_custom_call.1']
    #allocation6 [shape = 'u8[512]{0}', space=vmem, size = 0x400, scoped, tag = 'output window, operand 0, single buffered']
    %8 = vsyncpa [#allocation4], 0
    %9 = vsyncpa [#allocation5], 0
    // Predicated region
    $region2: #{tpu_custom_call.1} parent=1 // pred_check
      _
    $region3: #{tpu_custom_call.1} parent=1 // pred_check_branch
      %11 = sbr.rel (0) target = $region5
    $region4: #{tpu_custom_call.1} parent=1 // pred_region
      _
    $region5: #{tpu_custom_call.1} parent=1 // pred_fallthru
      _
    // Predicated region
    $region6: #{tpu_custom_call.1} parent=1 // pred_check
      _
    $region7: #{tpu_custom_call.1} parent=1 // pred_check_branch
      %13 = sbr.rel (0) target = $region9
    $region8: #{tpu_custom_call.1} parent=1 // pred_region
      %15 = vsyncadd [#allocation4], 0
      %s17 = sshll.u32 %s1, 4
      %s18 = int_to_ptr.hbm [resolvable:$true] %s17
      %s19 = sshll.u32 [#allocation3], 4
      %s20 = int_to_ptr.vmem [resolvable:$true] %s19
      %22 = dma.hbm_to_vmem [thread:$0]  %s18, 128, %s20, [#allocation4]
    $region9: #{tpu_custom_call.1} parent=1 // pred_fallthru
      _
    // Predicated region
    $region10: #{tpu_custom_call.1} parent=1 // pred_check
      _
    $region11: #{tpu_custom_call.1} parent=1 // pred_check_branch
      %24 = sbr.rel (0) target = $region13
    $region12: #{tpu_custom_call.1} parent=1 // pred_region
      _
    $region13: #{tpu_custom_call.1} parent=1 // pred_fallthru
      _
    // Predicated region
    $region14: #{tpu_custom_call.1} parent=1 // pred_check
      _
    $region15: #{tpu_custom_call.1} parent=1 // pred_check_branch
      %26 = sbr.rel (0) target = $region17
    $region16: #{tpu_custom_call.1} parent=1 // pred_region
      %28 = dma.done [#allocation4], 128
    $region17: #{tpu_custom_call.1} parent=1 // pred_fallthru
      _
    %p29 = scmp.eq.s32.totalorder 0, 0
    // Predicated region
    $region18: #{tpu_custom_call.1} parent=1 // pred_check
      %p30 = pneg %p29
    $region19: #{tpu_custom_call.1} parent=1 // pred_check_branch
      %32 = sbr.rel (%p30) target = $region21
    $region20: #{tpu_custom_call.1} parent=1 // pred_region
      %vm33 = vcmask 0
      %34 = vst.msk [vmem:[#allocation2] sm:$0x1] %vm33, 0.0
    $region21: #{tpu_custom_call.1} parent=1 // pred_fallthru
      _
    %v35 = vld [vmem:[%s0] sm:$0xff]
    %v36 = vld [vmem:[#allocation3] sm:$0xff]
    %v37 = vld [vmem:[%s2] sm:$0xff]
    %38 = vadd.xlane.f32.xlu0 %v35
    %v39 = vpop.xlane.xlu0 %38
    %40 = vadd.xlane.f32.xlu0 %v36
    %v41 = vpop.xlane.xlu0 %40
    %v42 = vmul.f32 %v35, %v36
    %43 = vadd.xlane.f32.xlu0 %v42
    %v44 = vpop.xlane.xlu0 %43
    %v45 = vmul.f32 %v35, %v35
    %46 = vadd.xlane.f32.xlu0 %v45
    %v47 = vpop.xlane.xlu0 %46
    %v48 = vmul.f32 %v36, %v36
    %49 = vadd.xlane.f32.xlu0 %v48
    %v50 = vpop.xlane.xlu0 %49
    %v51 = vmul.f32 %v39, %v41
    %v52 = vmul.f32 %v51, 0.0078125
    %v53 = vsub.f32 %v44, %v52
    %v54 = vmul.f32 %v39, %v39
    %v55 = vmul.f32 %v54, 0.0078125
    %v56 = vsub.f32 %v47, %v55
    %v57 = vmul.f32 %v41, %v41
    %v58 = vmul.f32 %v57, 0.0078125
    %v59 = vsub.f32 %v50, %v58
    %v60 = vmul.f32 %v56, %v59
    %v61 = vrsqrt.pop %v60
    %v62 = vmul.f32 %v61, %v60
    %v63 = vmul.f32 %v62, %v61
    %v64 = vmul.f32 0.5, %v63
    %v65 = vsub.f32 1.5, %v64
    %v66 = vmul.f32 %v61, %v65
    %vm67 = vweird.f32 %v60
    %vm68 = vweird.f32 %v61
    %vm69 = vmor %vm67, %vm68
    %v70 = vsel %vm69, %v61, %v66
    %v71 = vmul.f32 %v53, %v70
    %v72 = vadd.f32 %v71, 1e-05
    %v73 = vsub.f32 1.0, %v72
    %v74 = vsub.f32 %v73, %v37
    %v75 = vadd.f32 %v74, 1e-06
    %v76 = vmul.f32 %v75, %v75
    %v77 = vld [vmem:[#allocation2] sm:$0x1]
    %vm78 = vcmask 7168
    %v79 = vsel %vm78, %v76, 0.0
    %v80 = vrot.slane %v79, 4
    %v81 = vadd.f32 %v79, %v80
    %v82 = vrot.slane %v81, 2
    %v83 = vadd.f32 %v81, %v82
    %v84 = vrot.slane %v83, 1
    %v85 = vadd.f32 %v83, %v84
    %v86 = vadd.f32 %v77, %v85
    %vm87 = vcmask 0
    %88 = vst.msk [vmem:[#allocation2] sm:$0x1] %vm87, %v86
    // Predicated region
    $region22: #{tpu_custom_call.1} parent=1 // pred_check
      %p89 = pneg %p29
    $region23: #{tpu_custom_call.1} parent=1 // pred_check_branch
      %91 = sbr.rel (%p89) target = $region25
    $region24: #{tpu_custom_call.1} parent=1 // pred_region
      %v92 = vld [vmem:[#allocation2] sm:$0x1]
      %v93 = vmul.f32 %v92, 0.125
      %94 = vst.msk [vmem:[#allocation6] sm:$0x1] %vm87, %v93
    $region25: #{tpu_custom_call.1} parent=1 // pred_fallthru
      _
    // Predicated region
    $region26: #{tpu_custom_call.1} parent=1 // pred_check
      _
    $region27: #{tpu_custom_call.1} parent=1 // pred_check_branch
      %96 = sbr.rel (0) target = $region29
    $region28: #{tpu_custom_call.1} parent=1 // pred_region
      %98 = vsyncadd [#allocation5], 0
      %s100 = sshll.u32 [#allocation6], 4
      %s101 = int_to_ptr.vmem [resolvable:$true] %s100
      %s102 = sshll.u32 %s3, 4
      %s103 = int_to_ptr.hbm [resolvable:$true] %s102
      %105 = dma.vmem_to_hbm [thread:$0]  %s101, 16, %s103, [#allocation5]
    $region29: #{tpu_custom_call.1} parent=1 // pred_fallthru
      _
    // Predicated region
    $region30: #{tpu_custom_call.1} parent=1 // pred_check
      _
    $region31: #{tpu_custom_call.1} parent=1 // pred_check_branch
      %107 = sbr.rel (0) target = $region33
    $region32: #{tpu_custom_call.1} parent=1 // pred_region
      %109 = dma.done [#allocation5], 16
    $region33: #{tpu_custom_call.1} parent=1 // pred_fallthru
      _
    %110 = vsyncpa [#allocation4], 1
    %111 = vsyncpa [#allocation5], 1

</llo_original>
